<compile_context>
chip_gen: v7x
topology: tpu7x:2x2x1
jax: 0.10.0
libtpu: 0.0.40
codegen_flags: <defaults>
</compile_context>

<pallas_src>
import functools
import math

import jax
import jax.numpy as jnp
from jax import lax
from jax.experimental import pallas as pl
from jax.experimental.pallas import tpu as pltpu

VERY_SMALL_NUMBER = 1e-12


# ----------------------------- kernels --------------------------------------


def _phase1_kernel(adj_ref, x_ref, acc_ref, colsum_ref, *,
                   n_nodes, tile_n, mask_rows, compute_dtype):
    """acc[A, td] += adj_tile^T @ x_tile ; colsum[A, 1] += adj_tile^T @ 1.

    Grid = (din_tiles ["parallel"], node_tiles ["arbitrary"]).  acc is the
    resident output block for the current Din tile; colsum is scratch that is
    re-derived on every Din sweep.  On the last node tile the accumulated block
    is column-normalized in place (node_norm folded into a per-row rescale).
    """
    n_i = pl.program_id(1)

    @pl.when(n_i == 0)
    def _init():
        acc_ref[...] = jnp.zeros_like(acc_ref)
        colsum_ref[...] = jnp.zeros_like(colsum_ref)

    adj = adj_ref[...]
    x = x_ref[...]
    if mask_rows:
        # The last node tile may read past N: zero BOTH operands so unspecified
        # out-of-bounds contents (incl. NaN bit patterns) cannot reach the MXU.
        row = n_i * tile_n + lax.broadcasted_iota(jnp.int32, adj.shape, 0)
        adj = jnp.where(row < n_nodes, adj, jnp.zeros_like(adj))
        row_x = n_i * tile_n + lax.broadcasted_iota(jnp.int32, x.shape, 0)
        x = jnp.where(row_x < n_nodes, x, jnp.zeros_like(x))

    # adj^T @ x with no materialized transpose: contract the node (sublane)
    # axis of both operands; Mosaic handles the transposed-LHS matmul in VMEM.
    acc_ref[...] += lax.dot_general(
        adj.astype(compute_dtype), x.astype(compute_dtype),
        dimension_numbers=(((0,), (0,)), ((), ())),
        preferred_element_type=jnp.float32)

    # Column sums as a tiny matvec so the result lands directly as an [A, 1]
    # column (avoids a lane->sublane relayout of a (1, A) sublane reduce).
    ones = jnp.ones((adj.shape[0], 1), jnp.float32)
    colsum_ref[...] += lax.dot_general(
        adj.astype(jnp.float32), ones,
        dimension_numbers=(((0,), (0,)), ((), ())),
        preferred_element_type=jnp.float32)

    @pl.when(n_i == pl.num_programs(1) - 1)
    def _finalize():
        # exact reciprocal (approx is ~bf16 accurate; would break 1e-5 tol)
        inv_col = pl.reciprocal(
            jnp.maximum(colsum_ref[...], VERY_SMALL_NUMBER), approx=False)
        acc_ref[...] = acc_ref[...] * inv_col            # fold node_norm


def _phase2_kernel(adj_ref, mid_ref, out_ref, *, scale_output, compute_dtype):
    """out_tile = anchor_norm_tile @ mid, with the row normalization folded in.

    No masking needed: matmul rows are independent, and garbage rows past N in
    a partial last tile only produce garbage output rows that Pallas clips on
    write-back.
    """
    adj = adj_ref[...]
    row_sum = jnp.sum(adj.astype(jnp.float32), axis=1, keepdims=True)  # [tn, 1]
    inv_row = pl.reciprocal(
        jnp.maximum(row_sum, VERY_SMALL_NUMBER), approx=False)
    mid = mid_ref[...].astype(compute_dtype)
    if scale_output:
        # Dout < A: cheaper to scale the [tn, Dout] result than the [tn, A] adj.
        raw = jnp.dot(adj.astype(compute_dtype), mid,
                      preferred_element_type=jnp.float32)
        out = raw * inv_row
    else:
        scaled = (adj.astype(jnp.float32) * inv_row).astype(compute_dtype)
        out = jnp.dot(scaled, mid, preferred_element_type=jnp.float32)
    out_ref[...] = out.astype(out_ref.dtype)


# ----------------------------- wrapper ---------------------------------------


def _round_up(v, m):
    return ((v + m - 1) // m) * m


def _blk_bytes(rows, cols, itemsize=4):
    # VMEM footprint of one buffered block, padded to the native (8, 128) tile.
    return _round_up(max(rows, 1), 8) * _round_up(max(cols, 1), 128) * itemsize


def _vmem_capacity_bytes():
    try:
        info = pltpu.get_tpu_info()
        cap = getattr(info, "vmem_capacity_bytes", None)
        if cap:
            return int(cap)
    except Exception:
        pass
    return 64 << 20   # conservative per-core floor (v7x)


def _compiler_params(semantics, need_bytes, cap):
    # Always set the scoped-VMEM limit explicitly (v5e's default is only
    # 16 MiB), never below typical defaults, and never request all of physical
    # VMEM: leave >= 8 MiB headroom for compiler-internal scratch.
    limit = int(min(max(need_bytes, 32 << 20), cap - (8 << 20)))
    limit = max(limit, 16 << 20)
    return pltpu.CompilerParams(dimension_semantics=semantics,
                                vmem_limit_bytes=limit)


def _pick_tile_n(A, td, dout, cap):
    # Largest node tile whose double-buffered blocks + resident accumulator fit
    # comfortably (<= half of this generation's VMEM): 1024 on v5e/v6e for
    # modest feature dims, smaller on v7x / very wide features.
    budget = int(cap * 0.5)
    for tn in (1024, 512, 256, 128):
        p1 = (2 * (_blk_bytes(tn, A) + _blk_bytes(tn, td))
              + 2 * _blk_bytes(A, td) + _blk_bytes(A, 1))
        p2 = (2 * _blk_bytes(tn, A) + 2 * _blk_bytes(A, dout)
              + 2 * _blk_bytes(tn, dout))
        if max(p1, p2) + (2 << 20) <= budget:
            return tn
    return 128


def anchor_gcn_forward(x, adj, weight, *, tile_n=None):
    """AnchorGCN forward (anchor_mp path). x:[N,Din], adj:[N,A] (>=0), weight:[Din,Dout]."""
    N, Din = x.shape
    A = adj.shape[-1]
    Dout = weight.shape[-1]
    f32 = jnp.float32
    # Feed the MXU bf16 only when the caller already works in bf16 (keeps the
    # f32 path within 1e-5 of the reference).
    compute_dtype = jnp.bfloat16 if x.dtype == jnp.bfloat16 else f32

    cap = _vmem_capacity_bytes()

    # Optional Din split -> leading "parallel" grid axis (both TensorCores on
    # v7x).  Only when the halves stay lane-aligned (multiples of 128) and the
    # extra adj re-read per Din sweep is negligible vs. the x traffic
    # (harmless on 1-TC chips).
    if Din >= 256 and Din % 256 == 0 and A * 8 <= Din:
        grid_d, td = 2, Din // 2
    else:
        grid_d, td = 1, Din

    if tile_n is None:
        tile_n = _pick_tile_n(A, td, Dout, cap)
    tn = max(8, min(_round_up(tile_n, 8), _round_up(N, 8)))
    grid_n = pl.cdiv(N, tn)
    needs_mask = (N % tn) != 0

    # VMEM needs: 2x each pipelined input/output block + resident accumulator
    # + scratch + margin.
    need1 = (2 * (_blk_bytes(tn, A) + _blk_bytes(tn, td))
             + 2 * _blk_bytes(A, td) + _blk_bytes(A, 1) + (2 << 20))
    need2 = (2 * _blk_bytes(tn, A) + 2 * _blk_bytes(A, Dout)
             + 2 * _blk_bytes(tn, Dout) + (2 << 20))

    # ---- phase 1: acc = diag(1/colsum) @ (adj^T @ x) ------------------------
    p1 = functools.partial(_phase1_kernel, n_nodes=N, tile_n=tn,
                           mask_rows=needs_mask, compute_dtype=compute_dtype)
    acc = pl.pallas_call(
        p1,
        out_shape=jax.ShapeDtypeStruct((A, Din), f32),
        grid_spec=pltpu.PrefetchScalarGridSpec(
            num_scalar_prefetch=0,
            grid=(grid_d, grid_n),
            in_specs=[
                pl.BlockSpec((tn, A), lambda d, n: (n, 0)),     # adj tile (untransposed)
                pl.BlockSpec((tn, td), lambda d, n: (n, d)),    # x tile
            ],
            out_specs=pl.BlockSpec((A, td), lambda d, n: (0, d)),   # resident accum
            scratch_shapes=[pltpu.VMEM((A, 1), f32)],               # colsum accum
        ),
        compiler_params=_compiler_params(("parallel", "arbitrary"), need1, cap),
    )(adj, x)

    # ---- apply W once: tiny [A,Din] x [Din,Dout] matmul in plain XLA --------
    mid = jnp.dot(acc.astype(compute_dtype), weight.astype(compute_dtype),
                  preferred_element_type=f32)                    # [A, Dout] f32

    # ---- phase 2: out = anchor_norm @ mid -----------------------------------
    # NOTE: W never enters a kernel anymore (the review's main Buffered(1)
    # target); mid is only [A, Dout] so its default double-buffering is
    # negligible.  With very small A the [tn, A] adj tile is lane-sparse; a
    # transposed-layout phase 2 would fix that but would need the adj^T HBM
    # copy we intentionally removed.
    p2 = functools.partial(_phase2_kernel, scale_output=(Dout < A),
                           compute_dtype=compute_dtype)
    out = pl.pallas_call(
        p2,
        out_shape=jax.ShapeDtypeStruct((N, Dout), x.dtype),
        grid_spec=pltpu.PrefetchScalarGridSpec(
            num_scalar_prefetch=0,
            grid=(grid_n,),
            in_specs=[
                pl.BlockSpec((tn, A), lambda n: (n, 0)),        # adj tile
                pl.BlockSpec((A, Dout), lambda n: (0, 0)),      # mid resident
            ],
            out_specs=pl.BlockSpec((tn, Dout), lambda n: (n, 0)),
        ),
        compiler_params=_compiler_params(("parallel",), need2, cap),
    )(adj, mid)
    return out


# ----------------------------- test harness ----------------------------------


def xavier_uniform(key, fan_in, fan_out, dtype=jnp.float32):
    bound = math.sqrt(6.0 / (fan_in + fan_out))
    return jax.random.uniform(key, (fan_in, fan_out), dtype=dtype,
                              minval=-bound, maxval=bound)


def reference_forward(x, adj, weight):
    support = x @ weight
    node_norm = adj / jnp.maximum(
        jnp.sum(adj, axis=-2, keepdims=True), VERY_SMALL_NUMBER)
    anchor_norm = adj / jnp.maximum(
        jnp.sum(adj, axis=-1, keepdims=True), VERY_SMALL_NUMBER)
    return anchor_norm @ (jnp.swapaxes(node_norm, -1, -2) @ support)


if __name__ == "__main__":
    key = jax.random.PRNGKey(0)
    k_x, k_adj, k_w = jax.random.split(key, 3)

    # Small shapes; N is deliberately NOT a multiple of the node tile so both
    # multi-tile accumulation and the in-kernel partial-tile mask are exercised.
    N, A = 50, 12          # nodes, anchors
    Din, Dout = 32, 16     # in_features, out_features

    x = jax.random.normal(k_x, (N, Din), dtype=jnp.float32)
    adj = jax.random.uniform(k_adj, (N, A), dtype=jnp.float32)   # non-negative
    weight = xavier_uniform(k_w, Din, Dout)

    out = jax.block_until_ready(anchor_gcn_forward(x, adj, weight, tile_n=32))

    ref = reference_forward(x, adj, weight)
    assert out.shape == (N, Dout), out.shape
    assert jnp.allclose(out, ref, atol=1e-5, rtol=1e-5), (
        "mismatch vs reference, max abs err = "
        + str(float(jnp.max(jnp.abs(out - ref)))))

    print("KERNEL_OK")
</pallas_src>

<mosaic_0001>
module attributes {stable_mosaic.version = 11 : i64} {
  func.func @_phase1_kernel(%arg0: i32, %arg1: i32, %arg2: memref<32x12xf32, #tpu.memory_space<vmem>>, %arg3: memref<32x32xf32, #tpu.memory_space<vmem>>, %arg4: memref<12x32xf32, #tpu.memory_space<vmem>>, %arg5: memref<12x1xf32, #tpu.memory_space<vmem>>) attributes {dimension_semantics = [#tpu.dimension_semantics<parallel>, #tpu.dimension_semantics<arbitrary>], iteration_bounds = array<i64: 1, 2>, scalar_prefetch = 0 : i64, scratch_operands = 1 : i64, tpu.core_type = #tpu.core_type<tc>, window_params = [{transform_indices = @transform_0, window_bounds = array<i64: 32, 12>}, {transform_indices = @transform_1, window_bounds = array<i64: 32, 32>}, {transform_indices = @transform_2, window_bounds = array<i64: 12, 32>}]} {
    %c0_i32 = arith.constant 0 : i32
    %0 = arith.cmpi eq, %arg1, %c0_i32 : i32
    %1 = arith.extui %0 : i1 to i32
    %c0_i32_0 = arith.constant 0 : i32
    %2 = arith.cmpi ne, %1, %c0_i32_0 : i32
    scf.if %2 {
      %cst_19 = arith.constant 0.000000e+00 : f32
      %33 = vector.broadcast %cst_19 : f32 to vector<12x32xf32>
      %c0_20 = arith.constant 0 : index
      %c0_21 = arith.constant 0 : index
      %34 = vector.load %arg4[%c0_20, %c0_21] : memref<12x32xf32, #tpu.memory_space<vmem>>, vector<12x32xf32>
      tpu.vector_store %arg4[%c0_20, %c0_21], %33 {strides = array<i32>} : memref<12x32xf32, #tpu.memory_space<vmem>>, vector<12x32xf32>,
      %cst_22 = arith.constant 0.000000e+00 : f32
      %35 = vector.broadcast %cst_22 : f32 to vector<12x1xf32>
      %c0_23 = arith.constant 0 : index
      %c0_24 = arith.constant 0 : index
      %36 = vector.load %arg5[%c0_23, %c0_24] : memref<12x1xf32, #tpu.memory_space<vmem>>, vector<12x1xf32>
      tpu.vector_store %arg5[%c0_23, %c0_24], %35 {strides = array<i32>} : memref<12x1xf32, #tpu.memory_space<vmem>>, vector<12x1xf32>,
    } else {
    }
    %c0 = arith.constant 0 : index
    %c0_1 = arith.constant 0 : index
    %3 = vector.load %arg2[%c0, %c0_1] : memref<32x12xf32, #tpu.memory_space<vmem>>, vector<32x12xf32>
    %c0_2 = arith.constant 0 : index
    %c0_3 = arith.constant 0 : index
    %4 = vector.load %arg3[%c0_2, %c0_3] : memref<32x32xf32, #tpu.memory_space<vmem>>, vector<32x32xf32>
    %c32_i32 = arith.constant 32 : i32
    %5 = arith.muli %arg1, %c32_i32 : i32
    %6 = tpu.iota {dimensions = array<i32: 0>} : vector<32x12xi32>
    %7 = vector.broadcast %5 : i32 to vector<32x12xi32>
    %8 = arith.addi %7, %6 : vector<32x12xi32>
    %c50_i32 = arith.constant 50 : i32
    %9 = vector.broadcast %c50_i32 : i32 to vector<32x12xi32>
    %10 = arith.cmpi slt, %8, %9 : vector<32x12xi32>
    %cst = arith.constant 0.000000e+00 : f32
    %11 = vector.broadcast %cst : f32 to vector<32x12xf32>
    %12 = arith.select %10, %3, %11 : vector<32x12xi1>, vector<32x12xf32>
    %c32_i32_4 = arith.constant 32 : i32
    %13 = arith.muli %arg1, %c32_i32_4 : i32
    %14 = tpu.iota {dimensions = array<i32: 0>} : vector<32x32xi32>
    %15 = vector.broadcast %13 : i32 to vector<32x32xi32>
    %16 = arith.addi %15, %14 : vector<32x32xi32>
    %c50_i32_5 = arith.constant 50 : i32
    %17 = vector.broadcast %c50_i32_5 : i32 to vector<32x32xi32>
    %18 = arith.cmpi slt, %16, %17 : vector<32x32xi32>
    %cst_6 = arith.constant 0.000000e+00 : f32
    %19 = vector.broadcast %cst_6 : f32 to vector<32x32xf32>
    %20 = arith.select %18, %4, %19 : vector<32x32xi1>, vector<32x32xf32>
    %c0_7 = arith.constant 0 : index
    %c0_8 = arith.constant 0 : index
    %21 = vector.load %arg4[%c0_7, %c0_8] : memref<12x32xf32, #tpu.memory_space<vmem>>, vector<12x32xf32>
    %cst_9 = arith.constant dense<0.000000e+00> : vector<12x32xf32>
    %22 = tpu.matmul %12, %20, %cst_9 {dimension_numbers = #tpu.dot_dimension_numbers<[0], [0], [1], [1], [0, 1, 1, 1], [], []>} : vector<32x12xf32>, vector<32x32xf32>, vector<12x32xf32> -> vector<12x32xf32>
    %23 = arith.addf %21, %22 : vector<12x32xf32>
    %c0_10 = arith.constant 0 : index
    %c0_11 = arith.constant 0 : index
    %24 = vector.load %arg4[%c0_10, %c0_11] : memref<12x32xf32, #tpu.memory_space<vmem>>, vector<12x32xf32>
    tpu.vector_store %arg4[%c0_10, %c0_11], %23 {strides = array<i32>} : memref<12x32xf32, #tpu.memory_space<vmem>>, vector<12x32xf32>,
    %cst_12 = arith.constant 1.000000e+00 : f32
    %25 = vector.broadcast %cst_12 : f32 to vector<32x1xf32>
    %c0_13 = arith.constant 0 : index
    %c0_14 = arith.constant 0 : index
    %26 = vector.load %arg5[%c0_13, %c0_14] : memref<12x1xf32, #tpu.memory_space<vmem>>, vector<12x1xf32>
    %cst_15 = arith.constant dense<0.000000e+00> : vector<12x1xf32>
    %27 = tpu.matmul %12, %25, %cst_15 {dimension_numbers = #tpu.dot_dimension_numbers<[0], [0], [1], [1], [0, 1, 1, 1], [], []>} : vector<32x12xf32>, vector<32x1xf32>, vector<12x1xf32> -> vector<12x1xf32>
    %28 = arith.addf %26, %27 : vector<12x1xf32>
    %c0_16 = arith.constant 0 : index
    %c0_17 = arith.constant 0 : index
    %29 = vector.load %arg5[%c0_16, %c0_17] : memref<12x1xf32, #tpu.memory_space<vmem>>, vector<12x1xf32>
    tpu.vector_store %arg5[%c0_16, %c0_17], %28 {strides = array<i32>} : memref<12x1xf32, #tpu.memory_space<vmem>>, vector<12x1xf32>,
    %c1_i32 = arith.constant 1 : i32
    %30 = arith.cmpi eq, %arg1, %c1_i32 : i32
    %31 = arith.extui %30 : i1 to i32
    %c0_i32_18 = arith.constant 0 : i32
    %32 = arith.cmpi ne, %31, %c0_i32_18 : i32
    scf.if %32 {
      %c0_19 = arith.constant 0 : index
      %c0_20 = arith.constant 0 : index
      %33 = vector.load %arg5[%c0_19, %c0_20] : memref<12x1xf32, #tpu.memory_space<vmem>>, vector<12x1xf32>
      %cst_21 = arith.constant 9.99999996E-13 : f32
      %34 = vector.broadcast %cst_21 : f32 to vector<12x1xf32>
      %35 = arith.maximumf %33, %34 : vector<12x1xf32>
      %36 = tpu.reciprocal %35 : vector<12x1xf32> -> vector<12x1xf32>
      %c0_22 = arith.constant 0 : index
      %c0_23 = arith.constant 0 : index
      %37 = vector.load %arg4[%c0_22, %c0_23] : memref<12x32xf32, #tpu.memory_space<vmem>>, vector<12x32xf32>
      %38 = vector.broadcast %36 : vector<12x1xf32> to vector<12x32xf32>
      %39 = arith.mulf %37, %38 : vector<12x32xf32>
      %c0_24 = arith.constant 0 : index
      %c0_25 = arith.constant 0 : index
      %40 = vector.load %arg4[%c0_24, %c0_25] : memref<12x32xf32, #tpu.memory_space<vmem>>, vector<12x32xf32>
      tpu.vector_store %arg4[%c0_24, %c0_25], %39 {strides = array<i32>} : memref<12x32xf32, #tpu.memory_space<vmem>>, vector<12x32xf32>,
    } else {
    }
    return
  }
  func.func @transform_0(%arg0: i32, %arg1: i32) -> (i32, i32) {
    %c0_i32 = arith.constant 0 : i32
    %c0_i32_0 = arith.constant 0 : i32
    return %arg1, %c0_i32 : i32, i32
  }
  func.func @transform_1(%arg0: i32, %arg1: i32) -> (i32, i32) {
    %c0_i32 = arith.constant 0 : i32
    return %arg1, %arg0 : i32, i32
  }
  func.func @transform_2(%arg0: i32, %arg1: i32) -> (i32, i32) {
    %c0_i32 = arith.constant 0 : i32
    %c0_i32_0 = arith.constant 0 : i32
    return %c0_i32, %arg0 : i32, i32
  }
}

</mosaic_0001>

<llo_original>
// kernel: tpu_custom_call.1
$region0: #{tpu_custom_call.1}
  #allocation0 [shape = 'u32[]', space=smem, size = 0x4, offset = 0x4, fixed_abs, tag = 'smem constant byte address 0x4 - core index']
  #allocation1 [shape = 'u32[144,128]{1,0:T(1,128)}', space=vmem, size = 0x12000, scoped, tag = 'internal scratch']
  #allocation2 [shape = 'f32[12,1]{1,0:T(8,128)}', space=vmem, size = 0x2000, scoped, tag = 'scratch operand']
  %s0 = inlined_call_operand.vmem [shape: f32[50,12], index: 0, kind: input, shape index: {}]
  %s1 = inlined_call_operand.vmem [shape: f32[50,32], index: 1, kind: input, shape index: {}]
  %s2 = inlined_call_operand.hbm [shape: f32[12,32], index: 2, kind: output, shape index: {}]
  %s3 = sld [smem:[#allocation0]]
  $region49: #{tpu_custom_call.1} parent=0
    _
  %s5 = ssub.s32 1, %s3
  %s6 = scalar_select 0, %s5, %s3
  $region1: #{tpu_custom_call.1} parent=0
    #allocation3 [shape = 'u8[8192]{0}', space=vmem, size = 0x2000, scoped, tag = 'output window, operand 0, single buffered']
    #allocation4 [shape = 's32[2]{0}', space=sflag, size = 0x8, scoped, tag = 'scoped memory for tpu_custom_call.1']
    %7 = vsyncpa [#allocation4], 0
    loop: start=0, step=1, limit=4
    $region2: #{tpu_custom_call.1} parent=1 // loop_pre_header
      _
    $region3: #{tpu_custom_call.1} parent=1 // loop_header
      %s9 = sphi 0, %s13
      %p10 = scmp.ge.s32.totalorder %s9, 4
      %s16 = sphi 0, %s28
      %s17 = sphi 0, %s24
      %s18 = sphi 0, %s16
      %s19 = sphi 0, %s17
      %s20 = sphi 0, %s18
      %s21 = sphi 0, %s19
      %s31 = sphi 0, %s33
      %s34 = sphi 0, %s31
      %s35 = sphi 0, %s34
      %s51 = sphi 0, %s35
      %s59 = sphi 0, %s61
      %s62 = sphi 0, %s59
      %s63 = sphi 0, %s62
      %s79 = sphi 0, %s63
      %s85 = sphi 0, %s87
      %s88 = sphi 0, %s85
      %s89 = sphi 0, %s88
      %s105 = sphi 0, %s89
    $region4: #{tpu_custom_call.1} parent=1 // loop_header_branch
      %12 = sbr.rel (%p10) target = $region8
    $region5: #{tpu_custom_call.1} parent=1 // loop_body
      %s14 = ssub.s32 %s9, 1
      %s15 = ssub.s32 %s9, 2
      %s22 = sadd.s32 1, %s17
      %p23 = scmp.ge.s32.totalorder %s22, 2
      %s24 = scalar_select %p23, 0, %s22
      %s25 = sadd.s32 1, %s16
      %s26 = scalar_select %p23, %s25, %s16
      %p27 = scmp.ge.s32.totalorder %s26, 1
      %s28 = scalar_select %p27, 0, %s26
      %s29 = ssub.s32 %s17, %s24
      %p30 = scmp.eq.s32.totalorder %s29, 0
      %s32 = sadd.s32 %s31, 1
      %s33 = scalar_select %p30, %s31, %s32
      %p36 = pneg %p30
      %p37 = scmp.eq.s32.totalorder %s9, 1
      %p38 = por %p36, %p37
      %p39 = scmp.ne.s32.totalorder %s31, %s34
      %p40 = scmp.eq.s32.totalorder %s9, 0
      %p41 = por %p39, %p40
      %p42 = scmp.ne.s32.totalorder %s31, %s34
      %p43 = scmp.eq.s32.totalorder %s14, 1
      %p44 = por %p42, %p43
      %p45 = scmp.ne.s32.totalorder %s34, %s35
      %p46 = scmp.eq.s32.totalorder %s14, 0
      %p47 = por %p45, %p46
      %p48 = scmp.ne.s32.totalorder %s34, %s35
      %p49 = scmp.eq.s32.totalorder %s15, 1
      %p50 = por %p48, %p49
      %p52 = scmp.ne.s32.totalorder %s35, %s51
      %p53 = scmp.eq.s32.totalorder %s15, 0
      %p54 = por %p52, %p53
      %s55 = ssub.s32 %s17, %s24
      %s56 = ssub.s32 %s16, %s28
      %s57 = sor.u32 %s55, %s56
      %p58 = scmp.eq.s32.totalorder %s57, 0
      %s60 = sadd.s32 %s59, 1
      %s61 = scalar_select %p58, %s59, %s60
      %p64 = pneg %p58
      %p65 = scmp.eq.s32.totalorder %s9, 1
      %p66 = por %p64, %p65
      %p67 = scmp.ne.s32.totalorder %s59, %s62
      %p68 = scmp.eq.s32.totalorder %s9, 0
      %p69 = por %p67, %p68
      %p70 = scmp.ne.s32.totalorder %s59, %s62
      %p71 = scmp.eq.s32.totalorder %s14, 1
      %p72 = por %p70, %p71
      %p73 = scmp.ne.s32.totalorder %s62, %s63
      %p74 = scmp.eq.s32.totalorder %s14, 0
      %p75 = por %p73, %p74
      %p76 = scmp.ne.s32.totalorder %s62, %s63
      %p77 = scmp.eq.s32.totalorder %s15, 1
      %p78 = por %p76, %p77
      %p80 = scmp.ne.s32.totalorder %s63, %s79
      %p81 = scmp.eq.s32.totalorder %s15, 0
      %p82 = por %p80, %p81
      %s83 = ssub.s32 %s16, %s28
      %p84 = scmp.eq.s32.totalorder %s83, 0
      %s86 = sadd.s32 %s85, 1
      %s87 = scalar_select %p84, %s85, %s86
      %p90 = pneg %p84
      %p91 = scmp.eq.s32.totalorder %s9, 1
      %p92 = por %p90, %p91
      %p93 = scmp.ne.s32.totalorder %s85, %s88
      %p94 = scmp.eq.s32.totalorder %s9, 0
      %p95 = por %p93, %p94
      %p96 = scmp.ne.s32.totalorder %s85, %s88
      %p97 = scmp.eq.s32.totalorder %s14, 1
      %p98 = por %p96, %p97
      %p99 = scmp.ne.s32.totalorder %s88, %s89
      %p100 = scmp.eq.s32.totalorder %s14, 0
      %p101 = por %p99, %p100
      %p102 = scmp.ne.s32.totalorder %s88, %s89
      %p103 = scmp.eq.s32.totalorder %s15, 1
      %p104 = por %p102, %p103
      %p106 = scmp.ne.s32.totalorder %s89, %s105
      %p107 = scmp.eq.s32.totalorder %s15, 0
      %p108 = por %p106, %p107
      %p109 = scmp.le.s32.totalorder 1, %s9
      %p110 = scmp.lt.s32.totalorder %s9, 3
      %p111 = pnand %p109, %p110
      %p112 = pneg %p111
      // Predicated region
      $region9: #{tpu_custom_call.1} parent=5 // pred_check
        _
      $region10: #{tpu_custom_call.1} parent=5 // pred_check_branch
        %114 = sbr.rel (%p111) target = $region12
      $region11: #{tpu_custom_call.1} parent=5 // pred_region
        %s115 = ssub.s32 %s9, 1
      $region12: #{tpu_custom_call.1} parent=5 // pred_fallthru
        _
      %p116 = scmp.lt.s32.totalorder %s9, 2
      // Predicated region
      $region13: #{tpu_custom_call.1} parent=5 // pred_check
        %p117 = pneg %p116
      $region14: #{tpu_custom_call.1} parent=5 // pred_check_branch
        %119 = sbr.rel (%p117) target = $region16
      $region15: #{tpu_custom_call.1} parent=5 // pred_region
        // Predicated region
        $region17: #{tpu_custom_call.1} parent=15 // pred_check
          %p120 = pneg %p41
        $region18: #{tpu_custom_call.1} parent=15 // pred_check_branch
          %122 = sbr.rel (%p120) target = $region20
        $region19: #{tpu_custom_call.1} parent=15 // pred_region
          %s123 = smul.u32 4, %s17
          %s124 = ssub.s32 7, %s123
          %p125 = scmp.lt.s32.totalorder %s124, 4
          %s126 = scalar_select %p125, %s124, 4
          %s127 = smul.u32 128, %s126
          %p128 = scmp.lt.s32.totalorder %s123, 6
          %s129 = scalar_select %p128, %s123, 6
          %s130 = smul.addr %s129, 8
          %s131 = scalar_lea.vmem %s0, %s130
          %s132 = smul.u32 4, %s17
          %s133 = ssub.s32 7, %s132
          %p134 = scmp.lt.s32.totalorder %s133, 4
          %s135 = scalar_select %p134, %s133, 4
          %s136 = smul.u32 128, %s135
        $region20: #{tpu_custom_call.1} parent=15 // pred_fallthru
          _
        // Predicated region
        $region21: #{tpu_custom_call.1} parent=15 // pred_check
          %p137 = pneg %p69
        $region22: #{tpu_custom_call.1} parent=15 // pred_check_branch
          %139 = sbr.rel (%p137) target = $region24
        $region23: #{tpu_custom_call.1} parent=15 // pred_region
          %s140 = smul.u32 4, %s17
          %s141 = ssub.s32 7, %s140
          %p142 = scmp.lt.s32.totalorder %s141, 4
          %s143 = scalar_select %p142, %s141, 4
          %s144 = smul.u32 128, %s143
          %p145 = scmp.lt.s32.totalorder %s140, 6
          %s146 = scalar_select %p145, %s140, 6
          %p147 = scmp.lt.s32.totalorder %s16, 0
          %s148 = scalar_select %p147, %s16, 0
          %s149 = sadd.s32 %s148, %s146
          %s150 = smul.addr %s149, 8
          %s151 = scalar_lea.vmem %s1, %s150
          %s152 = smul.u32 4, %s17
          %s153 = ssub.s32 7, %s152
          %p154 = scmp.lt.s32.totalorder %s153, 4
          %s155 = scalar_select %p154, %s153, 4
          %s156 = smul.u32 128, %s155
        $region24: #{tpu_custom_call.1} parent=15 // pred_fallthru
          _
      $region16: #{tpu_custom_call.1} parent=5 // pred_fallthru
        _
      %p157 = scmp.le.s32.totalorder 1, %s9
      %p158 = scmp.lt.s32.totalorder %s9, 3
      %p159 = pnand %p157, %p158
      %p160 = pneg %p159
      // Predicated region
      $region25: #{tpu_custom_call.1} parent=5 // pred_check
        _
      $region26: #{tpu_custom_call.1} parent=5 // pred_check_branch
        %162 = sbr.rel (%p159) target = $region28
      $region27: #{tpu_custom_call.1} parent=5 // pred_region
        %s163 = ssub.s32 %s9, 1
        %s164 = smul.u32 4, %s19
        %s165 = ssub.s32 7, %s164
        %p166 = scmp.lt.s32.totalorder %s165, 4
        %s167 = scalar_select %p166, %s165, 4
        %s168 = smul.u32 128, %s167
        %p169 = scmp.lt.s32.totalorder %s164, 6
        %s170 = scalar_select %p169, %s164, 6
        %s171 = smul.addr %s170, 8
        %s172 = scalar_lea.vmem %s0, %s171
        %p173 = pneg %p47
        %p174 = pneg %p44
        %s175 = smul.u32 4, %s19
        %s176 = ssub.s32 7, %s175
        %p177 = scmp.lt.s32.totalorder %s176, 4
        %s178 = scalar_select %p177, %s176, 4
        %s179 = smul.u32 128, %s178
        %p180 = scmp.lt.s32.totalorder %s175, 6
        %s181 = scalar_select %p180, %s175, 6
        %p182 = scmp.lt.s32.totalorder %s18, 0
        %s183 = scalar_select %p182, %s18, 0
        %s184 = sadd.s32 %s183, %s181
        %s185 = smul.addr %s184, 8
        %s186 = scalar_lea.vmem %s1, %s185
        %p187 = pneg %p75
        %p188 = pneg %p72
        %p189 = pneg %p101
        %p190 = pneg %p98
        %s191 = smul.u32 4, %s19
        %s192 = ssub.s32 7, %s191
        %p193 = scmp.lt.s32.totalorder %s192, 4
        %s194 = scalar_select %p193, %s192, 4
        %s195 = smul.u32 128, %s194
        %p196 = scmp.lt.s32.totalorder %s191, 6
        %s197 = scalar_select %p196, %s191, 6
        %s198 = smul.addr %s197, 8
        %s199 = scalar_lea.vmem %s0, %s198
        %s200 = smul.u32 4, %s19
        %s201 = ssub.s32 7, %s200
        %p202 = scmp.lt.s32.totalorder %s201, 4
        %s203 = scalar_select %p202, %s201, 4
        %s204 = smul.u32 128, %s203
        %s205 = smul.u32 4, %s19
        %s206 = ssub.s32 7, %s205
        %p207 = scmp.lt.s32.totalorder %s206, 4
        %s208 = scalar_select %p207, %s206, 4
        %s209 = smul.u32 128, %s208
        %p210 = scmp.lt.s32.totalorder %s205, 6
        %s211 = scalar_select %p210, %s205, 6
        %p212 = scmp.lt.s32.totalorder %s18, 0
        %s213 = scalar_select %p212, %s18, 0
        %s214 = sadd.s32 %s213, %s211
        %s215 = smul.addr %s214, 8
        %s216 = scalar_lea.vmem %s1, %s215
        %s217 = smul.u32 4, %s19
        %s218 = ssub.s32 7, %s217
        %p219 = scmp.lt.s32.totalorder %s218, 4
        %s220 = scalar_select %p219, %s218, 4
        %s221 = smul.u32 128, %s220
        %p222 = scmp.eq.s32.totalorder %s19, 0
        // Predicated region
        $region29: #{tpu_custom_call.1} parent=27 // pred_check
          %p223 = pneg %p222
        $region30: #{tpu_custom_call.1} parent=27 // pred_check_branch
          %225 = sbr.rel (%p223) target = $region32
        $region31: #{tpu_custom_call.1} parent=27 // pred_region
          %vm226 = vcmask 261120
          %227 = vst.msk [vmem:[#allocation3] sm:$0xff] %vm226, 0.0
          %vm228 = vcmask 257024
          %229 = vst.msk [vmem:[#allocation3 + $0x8] sm:$0xf] %vm228, 0.0
          %vm230 = vcmask 7168
          %231 = vst.msk [vmem:[#allocation2] sm:$0xff] %vm230, 0.0
          %vm232 = vcmask 3072
          %233 = vst.msk [vmem:[#allocation2 + $0x8] sm:$0xf] %vm232, 0.0
        $region32: #{tpu_custom_call.1} parent=27 // pred_fallthru
          _
        %v234 = vld [vmem:[%s199] sm:$0xff]
        %v235 = vld [vmem:[%s199 + $0x8] sm:$0xff]
        %v236 = vld [vmem:[%s199 + $0x10] sm:$0xff]
        %v237 = vld [vmem:[%s199 + $0x18] sm:$0xff]
        %v238 = vld [vmem:[%s216] sm:$0xff]
        %v239 = vld [vmem:[%s216 + $0x8] sm:$0xff]
        %v240 = vld [vmem:[%s216 + $0x10] sm:$0xff]
        %v241 = vld [vmem:[%s216 + $0x18] sm:$0xff]
        %s242 = smul.u32 %s19, 32
        %v243 = vlaneseq
        %v244 = vshrl.u32 %v243, 7
        %v245 = vadd.s32 %v244, 8
        %v246 = vadd.s32 %v244, 16
        %v247 = vadd.s32 %v244, 24
        %v248 = vstv %s242
        %v249 = vadd.s32 %v248, %v244
        %v250 = vadd.s32 %v248, %v245
        %v251 = vadd.s32 %v248, %v246
        %v252 = vadd.s32 %v248, %v247
        %vm253 = vcmp.lt.s32.totalorder %v249, 50
        %vm254 = vcmp.lt.s32.totalorder %v250, 50
        %vm255 = vcmp.lt.s32.totalorder %v251, 50
        %vm256 = vcmp.lt.s32.totalorder %v252, 50
        %v257 = vsel %vm253, %v234, 0.0
        %v258 = vsel %vm254, %v235, 0.0
        %v259 = vsel %vm255, %v236, 0.0
        %v260 = vsel %vm256, %v237, 0.0
        %v261 = vsel %vm253, %v238, 0.0
        %v262 = vsel %vm254, %v239, 0.0
        %v263 = vsel %vm255, %v240, 0.0
        %v264 = vsel %vm256, %v241, 0.0
        %v265 = vld [vmem:[#allocation3] sm:$0xff]
        %v266 = vld [vmem:[#allocation3 + $0x8] sm:$0xf]
        %267 = vxpose.xlu0.b32.start [1/16] %v257, 128
        %268 = vxpose.xlu0.b32.cont [2/16] %v258, 128
        %269 = vxpose.xlu0.b32.cont [3/16] %v259, 128
        %270 = vxpose.xlu0.b32.cont [4/16] %v260, 128
        %271 = vxpose.xlu0.b32.cont [5/16] 0.0, 128
        %272 = vxpose.xlu0.b32.cont [6/16] 0.0, 128
        %273 = vxpose.xlu0.b32.cont [7/16] 0.0, 128
        %274 = vxpose.xlu0.b32.cont [8/16] 0.0, 128
        %275 = vxpose.xlu0.b32.cont [9/16] 0.0, 128
        %276 = vxpose.xlu0.b32.cont [10/16] 0.0, 128
        %277 = vxpose.xlu0.b32.cont [11/16] 0.0, 128
        %278 = vxpose.xlu0.b32.cont [12/16] 0.0, 128
        %279 = vxpose.xlu0.b32.cont [13/16] 0.0, 128
        %280 = vxpose.xlu0.b32.cont [14/16] 0.0, 128
        %281 = vxpose.xlu0.b32.cont [15/16] 0.0, 128
        %282 = vxpose.xlu0.b32.end [16/16] 0.0, 128
        %v283 = vpop.trf.xlu0
        %v284 = vpop.trf.xlu0
        %v285 = vpop.trf.xlu0
        %v286 = vpop.trf.xlu0
        %v287 = vpop.trf.xlu0
        %v288 = vpop.trf.xlu0
        %v289 = vpop.trf.xlu0
        %v290 = vpop.trf.xlu0
        %v291 = vpop.trf.xlu0
        %v292 = vpop.trf.xlu0
        %v293 = vpop.trf.xlu0
        %v294 = vpop.trf.xlu0
        %v295 = vpop.trf.xlu0
        %v296 = vpop.trf.xlu0
        %v297 = vpop.trf.xlu0
        %v298 = vpop.trf.xlu0
        %vm299 = vcmask 261120
        %v301 = vsel %vm299, %v283, 0
        %v304 = vsel %vm299, %v284, 0
        %306 = vmatprep.subr.mxu0 0.0
        %307 = vmatpush1.msra.mxu0 %v261
        %308 = vmatprep.subr.mxu0 0.0
        %309 = vmatpush1.msra.mxu0 %v262
        %310 = vmatprep.subr.mxu0 0.0
        %311 = vmatpush1.msra.mxu0 %v263
        %312 = vmatprep.subr.mxu0 0.0
        %313 = vmatpush1.msra.mxu0 %v264
        %314 = vmatprep.subr.mxu0 0.0
        %315 = vmatpush1.msra.mxu0 0.0
        %316 = vmatprep.subr.mxu0 0.0
        %317 = vmatpush1.msra.mxu0 0.0
        %318 = vmatprep.subr.mxu0 0.0
        %319 = vmatpush1.msra.mxu0 0.0
        %320 = vmatprep.subr.mxu0 0.0
        %321 = vmatpush1.msra.mxu0 0.0
        %322 = vmatprep.subr.mxu0 0.0
        %323 = vmatpush1.msra.mxu0 0.0
        %324 = vmatprep.subr.mxu0 0.0
        %325 = vmatpush1.msra.mxu0 0.0
        %326 = vmatprep.subr.mxu0 0.0
        %327 = vmatpush1.msra.mxu0 0.0
        %328 = vmatprep.subr.mxu0 0.0
        %329 = vmatpush1.msra.mxu0 0.0
        %330 = vmatprep.subr.mxu0 0.0
        %331 = vmatpush1.msra.mxu0 0.0
        %332 = vmatprep.subr.mxu0 0.0
        %333 = vmatpush1.msra.mxu0 0.0
        %334 = vmatprep.subr.mxu0 0.0
        %335 = vmatpush1.msra.mxu0 0.0
        %336 = vmatprep.subr.mxu0 0.0
        %337 = vmatpush1.msra.mxu0 0.0
        %338 = vmatprep.subr.mxu0 0.0
        %339 = vmatpush1.msra.mxu0 0.0
        %340 = vmatprep.subr.mxu0 0.0
        %341 = vmatpush1.msra.mxu0 0.0
        %342 = vmatprep.subr.mxu0 0.0
        %343 = vmatpush1.msra.mxu0 0.0
        %344 = vmatprep.subr.mxu0 0.0
        %345 = vmatpush1.msra.mxu0 0.0
        %346 = vmatprep.subr.mxu0 0.0
        %347 = vmatpush1.msra.mxu0 0.0
        %348 = vmatprep.subr.mxu0 0.0
        %349 = vmatpush1.msra.mxu0 0.0
        %350 = vmatprep.subr.mxu0 0.0
        %351 = vmatpush1.msra.mxu0 0.0
        %352 = vmatprep.subr.mxu0 0.0
        %353 = vmatpush1.msra.mxu0 0.0
        %354 = vmatprep.subr.mxu0 0.0
        %355 = vmatpush1.msra.mxu0 0.0
        %356 = vmatprep.subr.mxu0 0.0
        %357 = vmatpush1.msra.mxu0 0.0
        %358 = vmatprep.subr.mxu0 0.0
        %359 = vmatpush1.msra.mxu0 0.0
        %360 = vmatprep.subr.mxu0 0.0
        %361 = vmatpush1.msra.mxu0 0.0
        %362 = vmatprep.subr.mxu0 0.0
        %363 = vmatpush1.msra.mxu0 0.0
        %364 = vmatprep.subr.mxu0 0.0
        %365 = vmatpush1.msra.mxu0 0.0
        %366 = vmatprep.subr.mxu0 0.0
        %367 = vmatpush1.msra.mxu0 0.0
        %368 = vmatprep.subr.mxu0 0.0
        %369 = vmatpush1.msra.mxu0 0.0
        %370 = vmatprep.mubr.f32.mxu0 0.0
        %371 = vmatmul.mubr.f32.gmra.mrb[0].mxu0 %v301
        %v372 = vpop.f32.mrb[0].mxu0
        %v373 = vadd.f32 0.0, %v372
        %v374 = vpop.f32.mrb[0].mxu0
        %375 = vmatprep.mubr.f32.mxu0 0.0
        %376 = vmatmul.mubr.f32.gmra.mrb[0].mxu0 %v304
        %v377 = vpop.f32.mrb[0].mxu0
        %v378 = vadd.f32 0.0, %v377
        %v379 = vpop.f32.mrb[0].mxu0
        %380 = vdwg.mxu0
        %v381 = vadd.f32 %v265, %v373
        %v382 = vadd.f32 %v266, %v378
        %383 = vst.msk [vmem:[#allocation3] sm:$0xff] %vm299, %v381
        %vm384 = vcmask 257024
        %385 = vst.msk [vmem:[#allocation3 + $0x8] sm:$0xf] %vm384, %v382
        %v386 = vld [vmem:[#allocation2] sm:$0xff]
        %v387 = vld [vmem:[#allocation2 + $0x8] sm:$0xf]
        %388 = vmatprep.subr.mxu0 0.0
        %389 = vmatpush1.msra.mxu0 1.0
        %390 = vmatprep.subr.mxu0 0.0
        %391 = vmatpush1.msra.mxu0 1.0
        %392 = vmatprep.subr.mxu0 0.0
        %393 = vmatpush1.msra.mxu0 1.0
        %394 = vmatprep.subr.mxu0 0.0
        %395 = vmatpush1.msra.mxu0 1.0
        %396 = vmatprep.subr.mxu0 0.0
        %397 = vmatpush1.msra.mxu0 0.0
        %398 = vmatprep.subr.mxu0 0.0
        %399 = vmatpush1.msra.mxu0 0.0
        %400 = vmatprep.subr.mxu0 0.0
        %401 = vmatpush1.msra.mxu0 0.0
        %402 = vmatprep.subr.mxu0 0.0
        %403 = vmatpush1.msra.mxu0 0.0
        %404 = vmatprep.subr.mxu0 0.0
        %405 = vmatpush1.msra.mxu0 0.0
        %406 = vmatprep.subr.mxu0 0.0
        %407 = vmatpush1.msra.mxu0 0.0
        %408 = vmatprep.subr.mxu0 0.0
        %409 = vmatpush1.msra.mxu0 0.0
        %410 = vmatprep.subr.mxu0 0.0
        %411 = vmatpush1.msra.mxu0 0.0
        %412 = vmatprep.subr.mxu0 0.0
        %413 = vmatpush1.msra.mxu0 0.0
        %414 = vmatprep.subr.mxu0 0.0
        %415 = vmatpush1.msra.mxu0 0.0
        %416 = vmatprep.subr.mxu0 0.0
        %417 = vmatpush1.msra.mxu0 0.0
        %418 = vmatprep.subr.mxu0 0.0
        %419 = vmatpush1.msra.mxu0 0.0
        %420 = vmatprep.subr.mxu0 0.0
        %421 = vmatpush1.msra.mxu0 0.0
        %422 = vmatprep.subr.mxu0 0.0
        %423 = vmatpush1.msra.mxu0 0.0
        %424 = vmatprep.subr.mxu0 0.0
        %425 = vmatpush1.msra.mxu0 0.0
        %426 = vmatprep.subr.mxu0 0.0
        %427 = vmatpush1.msra.mxu0 0.0
        %428 = vmatprep.subr.mxu0 0.0
        %429 = vmatpush1.msra.mxu0 0.0
        %430 = vmatprep.subr.mxu0 0.0
        %431 = vmatpush1.msra.mxu0 0.0
        %432 = vmatprep.subr.mxu0 0.0
        %433 = vmatpush1.msra.mxu0 0.0
        %434 = vmatprep.subr.mxu0 0.0
        %435 = vmatpush1.msra.mxu0 0.0
        %436 = vmatprep.subr.mxu0 0.0
        %437 = vmatpush1.msra.mxu0 0.0
        %438 = vmatprep.subr.mxu0 0.0
        %439 = vmatpush1.msra.mxu0 0.0
        %440 = vmatprep.subr.mxu0 0.0
        %441 = vmatpush1.msra.mxu0 0.0
        %442 = vmatprep.subr.mxu0 0.0
        %443 = vmatpush1.msra.mxu0 0.0
        %444 = vmatprep.subr.mxu0 0.0
        %445 = vmatpush1.msra.mxu0 0.0
        %446 = vmatprep.subr.mxu0 0.0
        %447 = vmatpush1.msra.mxu0 0.0
        %448 = vmatprep.subr.mxu0 0.0
        %449 = vmatpush1.msra.mxu0 0.0
        %450 = vmatprep.subr.mxu0 0.0
        %451 = vmatpush1.msra.mxu0 0.0
        %452 = vmatprep.mubr.f32.mxu0 0.0
        %453 = vmatmul.mubr.f32.gmra.mrb[0].mxu0 %v301
        %v454 = vpop.f32.mrb[0].mxu0
        %v455 = vadd.f32 0.0, %v454
        %v456 = vpop.f32.mrb[0].mxu0
        %457 = vmatprep.mubr.f32.mxu0 0.0
        %458 = vmatmul.mubr.f32.gmra.mrb[0].mxu0 %v304
        %v459 = vpop.f32.mrb[0].mxu0
        %v460 = vadd.f32 0.0, %v459
        %v461 = vpop.f32.mrb[0].mxu0
        %462 = vdwg.mxu0
        %v463 = vadd.f32 %v386, %v455
        %v464 = vadd.f32 %v387, %v460
        %vm465 = vcmask 7168
        %466 = vst.msk [vmem:[#allocation2] sm:$0xff] %vm465, %v463
        %vm467 = vcmask 3072
        %468 = vst.msk [vmem:[#allocation2 + $0x8] sm:$0xf] %vm467, %v464
        %p469 = scmp.eq.s32.totalorder %s19, 1
        // Predicated region
        $region33: #{tpu_custom_call.1} parent=27 // pred_check
          %p470 = pneg %p469
        $region34: #{tpu_custom_call.1} parent=27 // pred_check_branch
          %472 = sbr.rel (%p470) target = $region36
        $region35: #{tpu_custom_call.1} parent=27 // pred_region
          %v473 = vld [vmem:[#allocation2] sm:$0xff]
          %v474 = vld [vmem:[#allocation2 + $0x8] sm:$0xf]
          %v475 = vmax.f32 %v473, 1e-12
          %v476 = vmax.f32 %v474, 1e-12
          %v477 = vrcp.pop %v475
          %v478 = vrcp.pop %v476
          %v479 = vld [vmem:[#allocation3] sm:$0xff]
          %v480 = vld [vmem:[#allocation3 + $0x8] sm:$0xf]
          %482 = vset.pattern.permute.xlu0 0
          %483 = vperm.xlu0 %482, %v477
          %v484 = vpop.permute.xlu0 %483
          %487 = vset.pattern.permute.xlu0 0
          %488 = vperm.xlu0 %487, %v478
          %v489 = vpop.permute.xlu0 %488
          %v491 = vmul.f32 %v479, %v484
          %v492 = vmul.f32 %v480, %v489
          %493 = vst.msk [vmem:[#allocation3] sm:$0xff] %vm299, %v491
          %494 = vst.msk [vmem:[#allocation3 + $0x8] sm:$0xf] %vm384, %v492
        $region36: #{tpu_custom_call.1} parent=27 // pred_fallthru
          _
        // Predicated region
        $region37: #{tpu_custom_call.1} parent=27 // pred_check
          %p495 = pneg %p98
        $region38: #{tpu_custom_call.1} parent=27 // pred_check_branch
          %497 = sbr.rel (%p495) target = $region40
        $region39: #{tpu_custom_call.1} parent=27 // pred_region
          %s499 = ssub.s32 256, 256
          %500 = vsyncadd [#allocation4], %s499
          %s501 = smul.addr %s18, 128
          %s502 = scalar_lea.hbm %s2, %s501
          %s503 = sshll.u32 [#allocation3], 4
          %s504 = int_to_ptr.vmem [resolvable:$true] %s503
          %509 = dma.vmem_to_hbm [thread:$0]  %s504, 256, %s502, [#allocation4], 128, 128, 8
        $region40: #{tpu_custom_call.1} parent=27 // pred_fallthru
          _
        // Predicated region
        $region41: #{tpu_custom_call.1} parent=27 // pred_check
          %p510 = pneg %p98
        $region42: #{tpu_custom_call.1} parent=27 // pred_check_branch
          %512 = sbr.rel (%p510) target = $region44
        $region43: #{tpu_custom_call.1} parent=27 // pred_region
          %513 = dma.done [#allocation4], 256
        $region44: #{tpu_custom_call.1} parent=27 // pred_fallthru
          _
      $region28: #{tpu_custom_call.1} parent=5 // pred_fallthru
        _
      %p514 = scmp.le.s32.totalorder 2, %s9
      // Predicated region
      $region45: #{tpu_custom_call.1} parent=5 // pred_check
        %p515 = pneg %p514
      $region46: #{tpu_custom_call.1} parent=5 // pred_check_branch
        %517 = sbr.rel (%p515) target = $region48
      $region47: #{tpu_custom_call.1} parent=5 // pred_region
        %s518 = ssub.s32 %s9, 2
      $region48: #{tpu_custom_call.1} parent=5 // pred_fallthru
        _
    $region6: #{tpu_custom_call.1} parent=1 // loop_footer
      %s13 = sadd.s32 1, %s9
    $region7: #{tpu_custom_call.1} parent=1 // loop_footer_branch
      %8 = sbr.rel target = $region3
    $region8: #{tpu_custom_call.1} parent=1 // loop_exit
      _
    %519 = vsyncpa [#allocation4], 1
    %s520 = scalar_lea.sflag [#allocation4], 1
    %521 = vsyncpa %s520, 1

</llo_original>
